<compile_context>
chip_gen: v7x
topology: tpu7x:2x2x1
jax: 0.10.0
libtpu: 0.0.40
codegen_flags: <defaults>
</compile_context>

<pallas_src>
import jax
import jax.numpy as jnp
from jax import lax
from jax.experimental import pallas as pl
from jax.experimental.pallas import tpu as pltpu


def lsa_kernel(lens_ref, x2col_ref, q_ref, pm_ref, mem_ref,
               w_eff_ref, wq_ref, wv_ref,
               ctx_ref, attw_ref):
    """Whole-batch LSA forward in a single grid step.

    lens_ref:  (B,)        int32 sequence lengths (SMEM, scalar prefetch)
    x2col_ref: (B*T, K*C)  im2col of the zero-padded 2-channel attention weights
    q_ref:     (B, Rq)     decoder queries
    pm_ref:    (B, T, D)   processed_memory
    mem_ref:   (B, T, E)   memory (encoder outputs)
    w_eff_ref: (K*C, D)    fused conv+dense weight
    wq_ref:    (Rq, D)     query_layer weight (transposed)
    wv_ref:    (1, D)      energy weight as a lane row
    ctx_ref:   (B, E)      attention context
    attw_ref:  (B, 1, T)   attention weights (lane-dense, time on lanes)
    """
    B, T, D = pm_ref.shape

    # LocationLayer (conv1d 2->F + Linear F->D fused) for all batches in one MXU push.
    loc = jnp.dot(x2col_ref[...], w_eff_ref[...],
                  preferred_element_type=jnp.float32).reshape(B, T, D)      # (B, T, D)
    # Query projection for all batches at once.
    pq = jnp.dot(q_ref[...], wq_ref[...],
                 preferred_element_type=jnp.float32)                        # (B, D)

    energies = jnp.tanh(pq[:, None, :] + loc + pm_ref[...])                 # (B, T, D)

    # Energy projection: VPU multiply + lane reduction instead of a 1-column MXU matmul.
    align = jnp.sum(energies * wv_ref[...], axis=-1, keepdims=True)         # (B, T, 1)

    # Rebuild the padding mask in-kernel from sequence lengths (SMEM scalars).
    # NOTE: a zero-length sequence yields all -inf -> NaN softmax, matching the
    # PyTorch reference behaviour for a fully-masked row.
    t_idx = lax.broadcasted_iota(jnp.int32, (B, T, 1), 1)
    b_idx = lax.broadcasted_iota(jnp.int32, (B, T, 1), 0)
    for b in range(B):  # static unroll, B is tiny
        align = jnp.where(jnp.logical_and(b_idx == b, t_idx >= lens_ref[b]),
                          -jnp.inf, align)

    # Softmax over time (time lives on the sublane axis -> sublane reductions).
    m = jnp.max(align, axis=1, keepdims=True)                               # (B, 1, 1)
    p = jnp.exp(align - m)                                                  # (B, T, 1)
    s = jnp.sum(p, axis=1, keepdims=True)                                   # (B, 1, 1)
    attw = p / s                                                            # (B, T, 1)

    # Context: attention-weighted sum of memory over time (sublane reduce, lane-dense E).
    ctx = jnp.sum(attw * mem_ref[...], axis=1)                              # (B, E)

    ctx_ref[...] = ctx.astype(ctx_ref.dtype)
    # Lane-dense attention-weight output: (B, T, 1) -> (B, 1, T) cheap XLU transpose.
    attw_ref[...] = jnp.transpose(attw, (0, 2, 1)).astype(attw_ref.dtype)


def prepare_lsa_weights(w_query, w_energy, w_conv, w_dense):
    """One-time weight preparation (hoisted out of the per-decoder-step path).

    w_query: (D, Rq), w_energy: (1, D), w_conv: (F, 2, K) [OIW], w_dense: (D, F).
    Returns (w_eff (K*2, D), wq_t (Rq, D), wv_row (1, D)).
    Conv1d + location dense are algebraically fused into one weight (valid: no bias /
    nonlinearity between them): W_eff[k*C + c, d] = sum_f w_conv[f, c, k] * w_dense[d, f].
    """
    Fn, C, K = w_conv.shape
    w_eff = jnp.transpose(w_conv, (2, 1, 0)).reshape(K * C, Fn) @ w_dense.T   # (K*C, D)
    wq_t = jnp.transpose(w_query)                                             # (Rq, D)
    wv_row = w_energy.reshape(1, -1)                                          # (1, D)
    return w_eff, wq_t, wv_row


def lsa_forward(query, memory, processed_memory, attention_weights_cat, lengths,
                w_eff, wq_t, wv_row):
    """query: (B, Rq), memory: (B, T, E), processed_memory: (B, T, D),
    attention_weights_cat: (B, 2, T), lengths: (B,) int (valid time steps per batch),
    plus weights from prepare_lsa_weights()."""
    B, Rq = query.shape
    _, T, E = memory.shape
    D = wq_t.shape[1]
    C = attention_weights_cat.shape[1]
    K = w_eff.shape[0] // C
    pad = (K - 1) // 2

    # Per-step data only: im2col of the attention weights (static slices, time-major rows).
    # x2col[b*T + t, k*C + c] = x_pad[b, c, t + k]
    x_pad = jnp.pad(attention_weights_cat, ((0, 0), (0, 0), (pad, pad)))
    cols = jnp.stack([x_pad[:, :, k:k + T] for k in range(K)], axis=1)        # (B, K, C, T)
    x2col = jnp.transpose(cols, (0, 3, 1, 2)).reshape(B * T, K * C)           # (B*T, K*C)

    lengths = lengths.astype(jnp.int32)

    ctx, attw = pl.pallas_call(
        lsa_kernel,
        out_shape=(jax.ShapeDtypeStruct((B, E), memory.dtype),
                   jax.ShapeDtypeStruct((B, 1, T), jnp.float32)),
        grid_spec=pltpu.PrefetchScalarGridSpec(
            num_scalar_prefetch=1,
            grid=(1,),
            in_specs=[
                pl.BlockSpec((B * T, K * C), lambda i, lens: (0, 0)),
                pl.BlockSpec((B, Rq), lambda i, lens: (0, 0)),
                pl.BlockSpec((B, T, D), lambda i, lens: (0, 0, 0)),
                pl.BlockSpec((B, T, E), lambda i, lens: (0, 0, 0)),
                pl.BlockSpec((K * C, D), lambda i, lens: (0, 0)),
                pl.BlockSpec((Rq, D), lambda i, lens: (0, 0)),
                pl.BlockSpec((1, D), lambda i, lens: (0, 0)),
            ],
            out_specs=(
                pl.BlockSpec((B, E), lambda i, lens: (0, 0)),
                pl.BlockSpec((B, 1, T), lambda i, lens: (0, 0, 0)),
            ),
        ),
        compiler_params=pltpu.CompilerParams(
            dimension_semantics=("arbitrary",)),
    )(lengths, x2col, query, processed_memory, memory, w_eff, wq_t, wv_row)

    return ctx, attw.reshape(B, T)


def lsa_ref(query, memory, processed_memory, attention_weights_cat, memory_mask,
            w_query, w_energy, w_conv, w_dense):
    """Plain-JAX reference matching the PyTorch LSA forward."""
    K = w_conv.shape[-1]
    pad = (K - 1) // 2
    pq = query @ w_query.T                                                   # (B, D)
    conv = lax.conv_general_dilated(
        attention_weights_cat, w_conv, window_strides=(1,),
        padding=[(pad, pad)], dimension_numbers=('NCH', 'OIH', 'NCH'))       # (B, F, T)
    loc = jnp.transpose(conv, (0, 2, 1)) @ w_dense.T                         # (B, T, D)
    align = jnp.squeeze(
        jnp.tanh(pq[:, None, :] + loc + processed_memory) @ w_energy.T, -1)  # (B, T)
    align = jnp.where(memory_mask, -jnp.inf, align)
    attw = jax.nn.softmax(align, axis=1)
    ctx = jnp.einsum('bt,bte->be', attw, memory)
    return ctx, attw


if __name__ == "__main__":
    # Small, deterministic hyperparameters consistent with the module.
    B, T = 2, 16
    attention_rnn_dim = 64
    embedding_dim = 128
    attention_dim = 128
    attention_location_n_filters = 32
    attention_location_kernel_size = 5   # odd -> padding preserves T

    key = jax.random.PRNGKey(0)
    kq, km, kpm, ka, kwq, kwe, kwc, kwd = jax.random.split(key, 8)

    query = jax.random.normal(kq, (B, attention_rnn_dim), dtype=jnp.float32)
    memory = jax.random.normal(km, (B, T, embedding_dim), dtype=jnp.float32)
    processed_memory = jax.random.normal(kpm, (B, T, attention_dim), dtype=jnp.float32)
    attention_weights_cat = jax.random.normal(ka, (B, 2, T), dtype=jnp.float32)
    # lengths[b] valid steps; positions >= length are padded (masked with -inf).
    lengths = jnp.array([T, T - 4], dtype=jnp.int32)
    memory_mask = jnp.arange(T)[None, :] >= lengths[:, None]                 # (B, T) bool

    # Xavier-uniform-style deterministic inits (LinearNorm / ConvNorm gains).
    def xavier(k, shape, fan_in, fan_out, gain=1.0):
        bound = gain * (6.0 / (fan_in + fan_out)) ** 0.5
        return jax.random.uniform(k, shape, minval=-bound, maxval=bound, dtype=jnp.float32)

    tanh_gain = 5.0 / 3.0
    w_query = xavier(kwq, (attention_dim, attention_rnn_dim),
                     attention_rnn_dim, attention_dim, tanh_gain)
    w_energy = xavier(kwe, (1, attention_dim), attention_dim, 1, 1.0)
    w_conv = xavier(kwc, (attention_location_n_filters, 2, attention_location_kernel_size),
                    2 * attention_location_kernel_size,
                    attention_location_n_filters * attention_location_kernel_size, 1.0)
    w_dense = xavier(kwd, (attention_dim, attention_location_n_filters),
                     attention_location_n_filters, attention_dim, tanh_gain)

    # One-time (per model) weight prep, hoisted out of the decoder-step path.
    w_eff, wq_t, wv_row = prepare_lsa_weights(w_query, w_energy, w_conv, w_dense)
    w_eff, wq_t, wv_row = jax.block_until_ready((w_eff, wq_t, wv_row))

    fwd = jax.jit(lsa_forward)
    ctx, attw = fwd(query, memory, processed_memory, attention_weights_cat,
                    lengths, w_eff, wq_t, wv_row)
    ctx, attw = jax.block_until_ready((ctx, attw))

    ctx_ref, attw_ref = lsa_ref(query, memory, processed_memory, attention_weights_cat,
                                memory_mask, w_query, w_energy, w_conv, w_dense)

    assert ctx.shape == (B, embedding_dim), ctx.shape
    assert attw.shape == (B, T), attw.shape
    assert jnp.allclose(attw, attw_ref, atol=1e-4, rtol=1e-4), "attention weights mismatch"
    assert jnp.allclose(ctx, ctx_ref, atol=1e-4, rtol=1e-4), "attention context mismatch"

    print("KERNEL_OK")
</pallas_src>

<mosaic_0001>
module attributes {stable_mosaic.version = 11 : i64} {
  func.func @lsa_kernel(%arg0: i32, %arg1: memref<2xi32, #tpu.memory_space<smem>>, %arg2: memref<32x10xf32, #tpu.memory_space<vmem>>, %arg3: memref<2x64xf32, #tpu.memory_space<vmem>>, %arg4: memref<2x16x128xf32, #tpu.memory_space<vmem>>, %arg5: memref<2x16x128xf32, #tpu.memory_space<vmem>>, %arg6: memref<10x128xf32, #tpu.memory_space<vmem>>, %arg7: memref<64x128xf32, #tpu.memory_space<vmem>>, %arg8: memref<1x128xf32, #tpu.memory_space<vmem>>, %arg9: memref<2x128xf32, #tpu.memory_space<vmem>>, %arg10: memref<2x1x16xf32, #tpu.memory_space<vmem>>) attributes {dimension_semantics = [#tpu.dimension_semantics<arbitrary>], iteration_bounds = array<i64: 1>, scalar_prefetch = 1 : i64, scratch_operands = 0 : i64, tpu.core_type = #tpu.core_type<tc>, window_params = [{pipeline_mode = #tpu.pipeline_mode<synchronous>, transform_indices = @transform_0, window_bounds = array<i64: 32, 10>}, {pipeline_mode = #tpu.pipeline_mode<synchronous>, transform_indices = @transform_1, window_bounds = array<i64: 2, 64>}, {pipeline_mode = #tpu.pipeline_mode<synchronous>, transform_indices = @transform_2, window_bounds = array<i64: 2, 16, 128>}, {pipeline_mode = #tpu.pipeline_mode<synchronous>, transform_indices = @transform_3, window_bounds = array<i64: 2, 16, 128>}, {pipeline_mode = #tpu.pipeline_mode<synchronous>, transform_indices = @transform_4, window_bounds = array<i64: 10, 128>}, {pipeline_mode = #tpu.pipeline_mode<synchronous>, transform_indices = @transform_5, window_bounds = array<i64: 64, 128>}, {pipeline_mode = #tpu.pipeline_mode<synchronous>, transform_indices = @transform_6, window_bounds = array<i64: 1, 128>}, {pipeline_mode = #tpu.pipeline_mode<synchronous>, transform_indices = @transform_7, window_bounds = array<i64: 2, 128>}, {pipeline_mode = #tpu.pipeline_mode<synchronous>, transform_indices = @transform_8, window_bounds = array<i64: 2, 1, 16>}]} {
    %c0 = arith.constant 0 : index
    %c0_0 = arith.constant 0 : index
    %0 = vector.load %arg2[%c0, %c0_0] : memref<32x10xf32, #tpu.memory_space<vmem>>, vector<32x10xf32>
    %c0_1 = arith.constant 0 : index
    %c0_2 = arith.constant 0 : index
    %1 = vector.load %arg6[%c0_1, %c0_2] : memref<10x128xf32, #tpu.memory_space<vmem>>, vector<10x128xf32>
    %cst = arith.constant dense<0.000000e+00> : vector<32x128xf32>
    %2 = tpu.matmul %0, %1, %cst {dimension_numbers = #tpu.dot_dimension_numbers<[1], [0], [0], [1], [0, 0, 1, 1], [], []>} : vector<32x10xf32>, vector<10x128xf32>, vector<32x128xf32> -> vector<32x128xf32>
    %3 = vector.shape_cast %2 : vector<32x128xf32> to vector<2x16x128xf32>
    %c0_3 = arith.constant 0 : index
    %c0_4 = arith.constant 0 : index
    %4 = vector.load %arg3[%c0_3, %c0_4] : memref<2x64xf32, #tpu.memory_space<vmem>>, vector<2x64xf32>
    %c0_5 = arith.constant 0 : index
    %c0_6 = arith.constant 0 : index
    %5 = vector.load %arg7[%c0_5, %c0_6] : memref<64x128xf32, #tpu.memory_space<vmem>>, vector<64x128xf32>
    %cst_7 = arith.constant dense<0.000000e+00> : vector<2x128xf32>
    %6 = tpu.matmul %4, %5, %cst_7 {dimension_numbers = #tpu.dot_dimension_numbers<[1], [0], [0], [1], [0, 0, 1, 1], [], []>} : vector<2x64xf32>, vector<64x128xf32>, vector<2x128xf32> -> vector<2x128xf32>
    %7 = vector.shape_cast %6 : vector<2x128xf32> to vector<2x1x128xf32>
    %8 = vector.broadcast %7 : vector<2x1x128xf32> to vector<2x16x128xf32>
    %9 = arith.addf %8, %3 : vector<2x16x128xf32>
    %c0_8 = arith.constant 0 : index
    %c0_9 = arith.constant 0 : index
    %c0_10 = arith.constant 0 : index
    %10 = vector.load %arg4[%c0_8, %c0_9, %c0_10] : memref<2x16x128xf32, #tpu.memory_space<vmem>>, vector<2x16x128xf32>
    %11 = arith.addf %9, %10 : vector<2x16x128xf32>
    %12 = math.tanh %11 : vector<2x16x128xf32>
    %c0_11 = arith.constant 0 : index
    %c0_12 = arith.constant 0 : index
    %13 = vector.load %arg8[%c0_11, %c0_12] : memref<1x128xf32, #tpu.memory_space<vmem>>, vector<1x128xf32>
    %14 = vector.shape_cast %13 : vector<1x128xf32> to vector<1x1x128xf32>
    %15 = vector.broadcast %14 : vector<1x1x128xf32> to vector<2x16x128xf32>
    %16 = arith.mulf %12, %15 : vector<2x16x128xf32>
    %cst_13 = arith.constant dense<0.000000e+00> : vector<2x16xf32>
    %17 = vector.multi_reduction <add>, %16, %cst_13 [2] : vector<2x16x128xf32> to vector<2x16xf32>
    %18 = vector.shape_cast %17 : vector<2x16xf32> to vector<2x16x1xf32>
    %19 = tpu.iota {dimensions = array<i32: 1>} : vector<2x16x1xi32>
    %20 = tpu.iota {dimensions = array<i32: 0>} : vector<2x16x1xi32>
    %c0_i32 = arith.constant 0 : i32
    %21 = vector.broadcast %c0_i32 : i32 to vector<2x16x1xi32>
    %22 = arith.cmpi eq, %20, %21 : vector<2x16x1xi32>
    %c0_14 = arith.constant 0 : index
    %23 = memref.load %arg1[%c0_14] : memref<2xi32, #tpu.memory_space<smem>>
    %24 = vector.broadcast %23 : i32 to vector<2x16x1xi32>
    %25 = arith.cmpi sge, %19, %24 : vector<2x16x1xi32>
    %26 = arith.andi %22, %25 : vector<2x16x1xi1>
    %cst_15 = arith.constant 0xFF800000 : f32
    %27 = vector.broadcast %cst_15 : f32 to vector<2x16x1xf32>
    %28 = arith.select %26, %27, %18 : vector<2x16x1xi1>, vector<2x16x1xf32>
    %c1_i32 = arith.constant 1 : i32
    %29 = vector.broadcast %c1_i32 : i32 to vector<2x16x1xi32>
    %30 = arith.cmpi eq, %20, %29 : vector<2x16x1xi32>
    %c1 = arith.constant 1 : index
    %31 = memref.load %arg1[%c1] : memref<2xi32, #tpu.memory_space<smem>>
    %32 = vector.broadcast %31 : i32 to vector<2x16x1xi32>
    %33 = arith.cmpi sge, %19, %32 : vector<2x16x1xi32>
    %34 = arith.andi %30, %33 : vector<2x16x1xi1>
    %cst_16 = arith.constant 0xFF800000 : f32
    %35 = vector.broadcast %cst_16 : f32 to vector<2x16x1xf32>
    %36 = arith.select %34, %35, %28 : vector<2x16x1xi1>, vector<2x16x1xf32>
    %cst_17 = arith.constant dense<0xFF800000> : vector<2x1xf32>
    %37 = vector.multi_reduction <maximumf>, %36, %cst_17 [1] : vector<2x16x1xf32> to vector<2x1xf32>
    %38 = vector.shape_cast %37 : vector<2x1xf32> to vector<2x1x1xf32>
    %39 = vector.broadcast %38 : vector<2x1x1xf32> to vector<2x16x1xf32>
    %40 = arith.subf %36, %39 : vector<2x16x1xf32>
    %41 = math.exp %40 : vector<2x16x1xf32>
    %cst_18 = arith.constant dense<0.000000e+00> : vector<2x1xf32>
    %42 = vector.multi_reduction <add>, %41, %cst_18 [1] : vector<2x16x1xf32> to vector<2x1xf32>
    %43 = vector.shape_cast %42 : vector<2x1xf32> to vector<2x1x1xf32>
    %44 = vector.broadcast %43 : vector<2x1x1xf32> to vector<2x16x1xf32>
    %45 = arith.divf %41, %44 : vector<2x16x1xf32>
    %c0_19 = arith.constant 0 : index
    %c0_20 = arith.constant 0 : index
    %c0_21 = arith.constant 0 : index
    %46 = vector.load %arg5[%c0_19, %c0_20, %c0_21] : memref<2x16x128xf32, #tpu.memory_space<vmem>>, vector<2x16x128xf32>
    %47 = vector.broadcast %45 : vector<2x16x1xf32> to vector<2x16x128xf32>
    %48 = arith.mulf %47, %46 : vector<2x16x128xf32>
    %cst_22 = arith.constant dense<0.000000e+00> : vector<2x128xf32>
    %49 = vector.multi_reduction <add>, %48, %cst_22 [1] : vector<2x16x128xf32> to vector<2x128xf32>
    %c0_23 = arith.constant 0 : index
    %c0_24 = arith.constant 0 : index
    %50 = vector.load %arg9[%c0_23, %c0_24] : memref<2x128xf32, #tpu.memory_space<vmem>>, vector<2x128xf32>
    tpu.vector_store %arg9[%c0_23, %c0_24], %49 {strides = array<i32>} : memref<2x128xf32, #tpu.memory_space<vmem>>, vector<2x128xf32>,
    %51 = tpu.transpose %45, [0, 2, 1] : vector<2x16x1xf32> -> vector<2x1x16xf32>
    %c0_25 = arith.constant 0 : index
    %c0_26 = arith.constant 0 : index
    %c0_27 = arith.constant 0 : index
    %52 = vector.load %arg10[%c0_25, %c0_26, %c0_27] : memref<2x1x16xf32, #tpu.memory_space<vmem>>, vector<2x1x16xf32>
    tpu.vector_store %arg10[%c0_25, %c0_26, %c0_27], %51 {strides = array<i32>} : memref<2x1x16xf32, #tpu.memory_space<vmem>>, vector<2x1x16xf32>,
    return
  }
  func.func @transform_0(%arg0: i32, %arg1: memref<2xi32, #tpu.memory_space<smem>>) -> (i32, i32) {
    %c0_i32 = arith.constant 0 : i32
    %c0_i32_0 = arith.constant 0 : i32
    %c0_i32_1 = arith.constant 0 : i32
    return %c0_i32, %c0_i32_0 : i32, i32
  }
  func.func @transform_1(%arg0: i32, %arg1: memref<2xi32, #tpu.memory_space<smem>>) -> (i32, i32) {
    %c0_i32 = arith.constant 0 : i32
    %c0_i32_0 = arith.constant 0 : i32
    %c0_i32_1 = arith.constant 0 : i32
    return %c0_i32, %c0_i32_0 : i32, i32
  }
  func.func @transform_2(%arg0: i32, %arg1: memref<2xi32, #tpu.memory_space<smem>>) -> (i32, i32, i32) {
    %c0_i32 = arith.constant 0 : i32
    %c0_i32_0 = arith.constant 0 : i32
    %c0_i32_1 = arith.constant 0 : i32
    %c0_i32_2 = arith.constant 0 : i32
    return %c0_i32, %c0_i32_0, %c0_i32_1 : i32, i32, i32
  }
  func.func @transform_3(%arg0: i32, %arg1: memref<2xi32, #tpu.memory_space<smem>>) -> (i32, i32, i32) {
    %c0_i32 = arith.constant 0 : i32
    %c0_i32_0 = arith.constant 0 : i32
    %c0_i32_1 = arith.constant 0 : i32
    %c0_i32_2 = arith.constant 0 : i32
    return %c0_i32, %c0_i32_0, %c0_i32_1 : i32, i32, i32
  }
  func.func @transform_4(%arg0: i32, %arg1: memref<2xi32, #tpu.memory_space<smem>>) -> (i32, i32) {
    %c0_i32 = arith.constant 0 : i32
    %c0_i32_0 = arith.constant 0 : i32
    %c0_i32_1 = arith.constant 0 : i32
    return %c0_i32, %c0_i32_0 : i32, i32
  }
  func.func @transform_5(%arg0: i32, %arg1: memref<2xi32, #tpu.memory_space<smem>>) -> (i32, i32) {
    %c0_i32 = arith.constant 0 : i32
    %c0_i32_0 = arith.constant 0 : i32
    %c0_i32_1 = arith.constant 0 : i32
    return %c0_i32, %c0_i32_0 : i32, i32
  }
  func.func @transform_6(%arg0: i32, %arg1: memref<2xi32, #tpu.memory_space<smem>>) -> (i32, i32) {
    %c0_i32 = arith.constant 0 : i32
    %c0_i32_0 = arith.constant 0 : i32
    %c0_i32_1 = arith.constant 0 : i32
    return %c0_i32, %c0_i32_0 : i32, i32
  }
  func.func @transform_7(%arg0: i32, %arg1: memref<2xi32, #tpu.memory_space<smem>>) -> (i32, i32) {
    %c0_i32 = arith.constant 0 : i32
    %c0_i32_0 = arith.constant 0 : i32
    %c0_i32_1 = arith.constant 0 : i32
    return %c0_i32, %c0_i32_0 : i32, i32
  }
  func.func @transform_8(%arg0: i32, %arg1: memref<2xi32, #tpu.memory_space<smem>>) -> (i32, i32, i32) {
    %c0_i32 = arith.constant 0 : i32
    %c0_i32_0 = arith.constant 0 : i32
    %c0_i32_1 = arith.constant 0 : i32
    %c0_i32_2 = arith.constant 0 : i32
    return %c0_i32, %c0_i32_0, %c0_i32_1 : i32, i32, i32
  }
}

</mosaic_0001>

<llo_original>
// kernel: lsa_forward.1
$region0: #{lsa_forward.1}
  #allocation0 [shape = 'u32[]', space=smem, size = 0x4, offset = 0x4, fixed_abs, tag = 'smem constant byte address 0x4 - core index']
  #allocation1 [shape = 'u32[144,128]{1,0:T(1,128)}', space=vmem, size = 0x12000, scoped, tag = 'internal scratch']
  #allocation2 [shape = 's32[1]{0}', space=sflag, size = 0x4, scoped, tag = 'scoped memory for lsa_forward.1']
  #allocation3 [shape = 'u8[512]{0}', space=smem, size = 0x200, scoped, tag = 'prefetched SMEM operand 0']
  %s0 = inlined_call_operand.vmem [shape: s32[2], index: 0, kind: input, shape index: {}]
  %s1 = inlined_call_operand.vmem [shape: f32[32,10], index: 1, kind: input, shape index: {}]
  %s2 = inlined_call_operand.vmem [shape: f32[2,64], index: 2, kind: input, shape index: {}]
  %s3 = inlined_call_operand.vmem [shape: f32[2,16,128], index: 3, kind: input, shape index: {}]
  %s4 = inlined_call_operand.vmem [shape: f32[2,16,128], index: 4, kind: input, shape index: {}]
  %s5 = inlined_call_operand.vmem [shape: f32[10,128], index: 5, kind: input, shape index: {}]
  %s6 = inlined_call_operand.vmem [shape: f32[64,128], index: 6, kind: input, shape index: {}]
  %s7 = inlined_call_operand.vmem [shape: f32[1,128], index: 7, kind: input, shape index: {}]
  %s8 = inlined_call_operand.hbm [shape: f32[2,128], index: 8, kind: output, shape index: {0}]
  %s9 = inlined_call_operand.hbm [shape: f32[2,1,16], index: 9, kind: output, shape index: {1}]
  %10 = xla_tuple %s8, %s9
  %s11 = sld [smem:[#allocation0]]
  $region46: #{lsa_forward.1} parent=0
    _
  %s13 = ssub.s32 1, %s11
  %s14 = scalar_select 0, %s13, %s11
  %s15 = sshll.u32 %s0, 4
  %s16 = int_to_ptr.vmem [resolvable:$true] %s15
  %18 = dma.vmem_to_smem %s16, 16, [#allocation3], [#allocation2]
  %19 = dma.done [#allocation2], 16
  %20 = sfence
  $region1: #{lsa_forward.1} parent=0
    #allocation4 [shape = 'u8[1024]{0}', space=vmem, size = 0x400, scoped, tag = 'output window, operand 0, single buffered']
    #allocation5 [shape = 's32[1]{0}', space=sflag, size = 0x4, scoped, tag = 'scoped memory for lsa_forward.1']
    #allocation6 [shape = 'u8[1024]{0}', space=vmem, size = 0x400, scoped, tag = 'output window, operand 1, single buffered']
    #allocation7 [shape = 's32[1]{0}', space=sflag, size = 0x4, scoped, tag = 'scoped memory for lsa_forward.1']
    %21 = vsyncpa [#allocation5], 0
    %22 = vsyncpa [#allocation7], 0
    // Predicated region
    $region2: #{lsa_forward.1} parent=1 // pred_check
      _
    $region3: #{lsa_forward.1} parent=1 // pred_check_branch
      %24 = sbr.rel (0) target = $region5
    $region4: #{lsa_forward.1} parent=1 // pred_region
      _
    $region5: #{lsa_forward.1} parent=1 // pred_fallthru
      _
    // Predicated region
    $region6: #{lsa_forward.1} parent=1 // pred_check
      _
    $region7: #{lsa_forward.1} parent=1 // pred_check_branch
      %26 = sbr.rel (0) target = $region9
    $region8: #{lsa_forward.1} parent=1 // pred_region
      _
    $region9: #{lsa_forward.1} parent=1 // pred_fallthru
      _
    // Predicated region
    $region10: #{lsa_forward.1} parent=1 // pred_check
      _
    $region11: #{lsa_forward.1} parent=1 // pred_check_branch
      %28 = sbr.rel (0) target = $region13
    $region12: #{lsa_forward.1} parent=1 // pred_region
      _
    $region13: #{lsa_forward.1} parent=1 // pred_fallthru
      _
    // Predicated region
    $region14: #{lsa_forward.1} parent=1 // pred_check
      _
    $region15: #{lsa_forward.1} parent=1 // pred_check_branch
      %30 = sbr.rel (0) target = $region17
    $region16: #{lsa_forward.1} parent=1 // pred_region
      _
    $region17: #{lsa_forward.1} parent=1 // pred_fallthru
      _
    // Predicated region
    $region18: #{lsa_forward.1} parent=1 // pred_check
      _
    $region19: #{lsa_forward.1} parent=1 // pred_check_branch
      %32 = sbr.rel (0) target = $region21
    $region20: #{lsa_forward.1} parent=1 // pred_region
      _
    $region21: #{lsa_forward.1} parent=1 // pred_fallthru
      _
    // Predicated region
    $region22: #{lsa_forward.1} parent=1 // pred_check
      _
    $region23: #{lsa_forward.1} parent=1 // pred_check_branch
      %34 = sbr.rel (0) target = $region25
    $region24: #{lsa_forward.1} parent=1 // pred_region
      _
    $region25: #{lsa_forward.1} parent=1 // pred_fallthru
      _
    // Predicated region
    $region26: #{lsa_forward.1} parent=1 // pred_check
      _
    $region27: #{lsa_forward.1} parent=1 // pred_check_branch
      %36 = sbr.rel (0) target = $region29
    $region28: #{lsa_forward.1} parent=1 // pred_region
      _
    $region29: #{lsa_forward.1} parent=1 // pred_fallthru
      _
    %v37 = vld [vmem:[%s1] sm:$0xff]
    %v38 = vld [vmem:[%s1 + $0x8] sm:$0xff]
    %v39 = vld [vmem:[%s1 + $0x10] sm:$0xff]
    %v40 = vld [vmem:[%s1 + $0x18] sm:$0xff]
    %v41 = vld [vmem:[%s5] sm:$0xff]
    %v42 = vld [vmem:[%s5 + $0x8] sm:$0x3]
    %vm43 = vcmask 80896
    %v45 = vsel %vm43, %v37, 0
    %v48 = vsel %vm43, %v38, 0
    %v51 = vsel %vm43, %v39, 0
    %v54 = vsel %vm43, %v40, 0
    %vm56 = vcmask 1041408
    %v58 = vsel %vm56, %v42, 0
    %60 = vmatprep.subr.mxu0 0.0
    %61 = vmatpush1.msra.mxu0 %v41
    %62 = vmatprep.subr.mxu0 0.0
    %63 = vmatpush1.msra.mxu0 %v58
    %64 = vmatprep.subr.mxu0 0.0
    %65 = vmatpush1.msra.mxu0 0.0
    %66 = vmatprep.subr.mxu0 0.0
    %67 = vmatpush1.msra.mxu0 0.0
    %68 = vmatprep.subr.mxu0 0.0
    %69 = vmatpush1.msra.mxu0 0.0
    %70 = vmatprep.subr.mxu0 0.0
    %71 = vmatpush1.msra.mxu0 0.0
    %72 = vmatprep.subr.mxu0 0.0
    %73 = vmatpush1.msra.mxu0 0.0
    %74 = vmatprep.subr.mxu0 0.0
    %75 = vmatpush1.msra.mxu0 0.0
    %76 = vmatprep.subr.mxu0 0.0
    %77 = vmatpush1.msra.mxu0 0.0
    %78 = vmatprep.subr.mxu0 0.0
    %79 = vmatpush1.msra.mxu0 0.0
    %80 = vmatprep.subr.mxu0 0.0
    %81 = vmatpush1.msra.mxu0 0.0
    %82 = vmatprep.subr.mxu0 0.0
    %83 = vmatpush1.msra.mxu0 0.0
    %84 = vmatprep.subr.mxu0 0.0
    %85 = vmatpush1.msra.mxu0 0.0
    %86 = vmatprep.subr.mxu0 0.0
    %87 = vmatpush1.msra.mxu0 0.0
    %88 = vmatprep.subr.mxu0 0.0
    %89 = vmatpush1.msra.mxu0 0.0
    %90 = vmatprep.subr.mxu0 0.0
    %91 = vmatpush1.msra.mxu0 0.0
    %92 = vmatprep.subr.mxu0 0.0
    %93 = vmatpush1.msra.mxu0 0.0
    %94 = vmatprep.subr.mxu0 0.0
    %95 = vmatpush1.msra.mxu0 0.0
    %96 = vmatprep.subr.mxu0 0.0
    %97 = vmatpush1.msra.mxu0 0.0
    %98 = vmatprep.subr.mxu0 0.0
    %99 = vmatpush1.msra.mxu0 0.0
    %100 = vmatprep.subr.mxu0 0.0
    %101 = vmatpush1.msra.mxu0 0.0
    %102 = vmatprep.subr.mxu0 0.0
    %103 = vmatpush1.msra.mxu0 0.0
    %104 = vmatprep.subr.mxu0 0.0
    %105 = vmatpush1.msra.mxu0 0.0
    %106 = vmatprep.subr.mxu0 0.0
    %107 = vmatpush1.msra.mxu0 0.0
    %108 = vmatprep.subr.mxu0 0.0
    %109 = vmatpush1.msra.mxu0 0.0
    %110 = vmatprep.subr.mxu0 0.0
    %111 = vmatpush1.msra.mxu0 0.0
    %112 = vmatprep.subr.mxu0 0.0
    %113 = vmatpush1.msra.mxu0 0.0
    %114 = vmatprep.subr.mxu0 0.0
    %115 = vmatpush1.msra.mxu0 0.0
    %116 = vmatprep.subr.mxu0 0.0
    %117 = vmatpush1.msra.mxu0 0.0
    %118 = vmatprep.subr.mxu0 0.0
    %119 = vmatpush1.msra.mxu0 0.0
    %120 = vmatprep.subr.mxu0 0.0
    %121 = vmatpush1.msra.mxu0 0.0
    %122 = vmatprep.subr.mxu0 0.0
    %123 = vmatpush1.msra.mxu0 0.0
    %124 = vmatprep.mubr.f32.mxu0 0.0
    %125 = vmatmul.mubr.f32.gmra.mrb[0].mxu0 %v45
    %v126 = vpop.f32.mrb[0].mxu0
    %v127 = vadd.f32 0.0, %v126
    %v128 = vpop.f32.mrb[0].mxu0
    %129 = vmatprep.mubr.f32.mxu0 0.0
    %130 = vmatmul.mubr.f32.gmra.mrb[0].mxu0 %v48
    %v131 = vpop.f32.mrb[0].mxu0
    %v132 = vadd.f32 0.0, %v131
    %v133 = vpop.f32.mrb[0].mxu0
    %134 = vmatprep.mubr.f32.mxu0 0.0
    %135 = vmatmul.mubr.f32.gmra.mrb[0].mxu0 %v51
    %v136 = vpop.f32.mrb[0].mxu0
    %v137 = vadd.f32 0.0, %v136
    %v138 = vpop.f32.mrb[0].mxu0
    %139 = vmatprep.mubr.f32.mxu0 0.0
    %140 = vmatmul.mubr.f32.gmra.mrb[0].mxu0 %v54
    %v141 = vpop.f32.mrb[0].mxu0
    %v142 = vadd.f32 0.0, %v141
    %v143 = vpop.f32.mrb[0].mxu0
    %144 = vdwg.mxu0
    %v145 = vld [vmem:[%s2] sm:$0x3]
    %v146 = vld [vmem:[%s6] sm:$0xff]
    %v147 = vld [vmem:[%s6 + $0x8] sm:$0xff]
    %v148 = vld [vmem:[%s6 + $0x10] sm:$0xff]
    %v149 = vld [vmem:[%s6 + $0x18] sm:$0xff]
    %v150 = vld [vmem:[%s6 + $0x20] sm:$0xff]
    %v151 = vld [vmem:[%s6 + $0x28] sm:$0xff]
    %v152 = vld [vmem:[%s6 + $0x30] sm:$0xff]
    %v153 = vld [vmem:[%s6 + $0x38] sm:$0xff]
    %vm154 = vcmask 523264
    %v156 = vsel %vm154, %v145, 0
    %158 = vmatprep.subr.mxu0 0.0
    %159 = vmatpush1.msra.mxu0 %v146
    %160 = vmatprep.subr.mxu0 0.0
    %161 = vmatpush1.msra.mxu0 %v147
    %162 = vmatprep.subr.mxu0 0.0
    %163 = vmatpush1.msra.mxu0 %v148
    %164 = vmatprep.subr.mxu0 0.0
    %165 = vmatpush1.msra.mxu0 %v149
    %166 = vmatprep.subr.mxu0 0.0
    %167 = vmatpush1.msra.mxu0 %v150
    %168 = vmatprep.subr.mxu0 0.0
    %169 = vmatpush1.msra.mxu0 %v151
    %170 = vmatprep.subr.mxu0 0.0
    %171 = vmatpush1.msra.mxu0 %v152
    %172 = vmatprep.subr.mxu0 0.0
    %173 = vmatpush1.msra.mxu0 %v153
    %174 = vmatprep.subr.mxu0 0.0
    %175 = vmatpush1.msra.mxu0 0.0
    %176 = vmatprep.subr.mxu0 0.0
    %177 = vmatpush1.msra.mxu0 0.0
    %178 = vmatprep.subr.mxu0 0.0
    %179 = vmatpush1.msra.mxu0 0.0
    %180 = vmatprep.subr.mxu0 0.0
    %181 = vmatpush1.msra.mxu0 0.0
    %182 = vmatprep.subr.mxu0 0.0
    %183 = vmatpush1.msra.mxu0 0.0
    %184 = vmatprep.subr.mxu0 0.0
    %185 = vmatpush1.msra.mxu0 0.0
    %186 = vmatprep.subr.mxu0 0.0
    %187 = vmatpush1.msra.mxu0 0.0
    %188 = vmatprep.subr.mxu0 0.0
    %189 = vmatpush1.msra.mxu0 0.0
    %190 = vmatprep.subr.mxu0 0.0
    %191 = vmatpush1.msra.mxu0 0.0
    %192 = vmatprep.subr.mxu0 0.0
    %193 = vmatpush1.msra.mxu0 0.0
    %194 = vmatprep.subr.mxu0 0.0
    %195 = vmatpush1.msra.mxu0 0.0
    %196 = vmatprep.subr.mxu0 0.0
    %197 = vmatpush1.msra.mxu0 0.0
    %198 = vmatprep.subr.mxu0 0.0
    %199 = vmatpush1.msra.mxu0 0.0
    %200 = vmatprep.subr.mxu0 0.0
    %201 = vmatpush1.msra.mxu0 0.0
    %202 = vmatprep.subr.mxu0 0.0
    %203 = vmatpush1.msra.mxu0 0.0
    %204 = vmatprep.subr.mxu0 0.0
    %205 = vmatpush1.msra.mxu0 0.0
    %206 = vmatprep.subr.mxu0 0.0
    %207 = vmatpush1.msra.mxu0 0.0
    %208 = vmatprep.subr.mxu0 0.0
    %209 = vmatpush1.msra.mxu0 0.0
    %210 = vmatprep.subr.mxu0 0.0
    %211 = vmatpush1.msra.mxu0 0.0
    %212 = vmatprep.subr.mxu0 0.0
    %213 = vmatpush1.msra.mxu0 0.0
    %214 = vmatprep.subr.mxu0 0.0
    %215 = vmatpush1.msra.mxu0 0.0
    %216 = vmatprep.subr.mxu0 0.0
    %217 = vmatpush1.msra.mxu0 0.0
    %218 = vmatprep.subr.mxu0 0.0
    %219 = vmatpush1.msra.mxu0 0.0
    %220 = vmatprep.subr.mxu0 0.0
    %221 = vmatpush1.msra.mxu0 0.0
    %222 = vmatprep.mubr.f32.mxu0 0.0
    %223 = vmatmul.mubr.f32.gmra.mrb[0].mxu0 %v156
    %v224 = vpop.f32.mrb[0].mxu0
    %v225 = vadd.f32 0.0, %v224
    %v226 = vpop.f32.mrb[0].mxu0
    %227 = vdwg.mxu0
    %v230 = vunpack.c.l.s4 1966171168
    %v231 = vunpack.c.0.s8 %v230
    %v232 = vlaneseq
    %v233 = vshrl.u32 %v232, 7
    %v234 = vsub.s32 %v231, %v233
    %v235 = vrot.slane %v225, %v234
    %v236 = vcombine.high %v235, %v235
    %v238 = vunpack.c.l.s4 1966171168
    %v239 = vunpack.c.0.s8 %v238
    %v240 = vlaneseq
    %v241 = vshrl.u32 %v240, 7
    %v242 = vsub.s32 %v239, %v241
    %v243 = vrot.slane %v235, %v242
    %v245 = vunpack.c.l.s4 1966171168
    %v246 = vunpack.c.0.s8 %v245
    %v247 = vlaneseq
    %v248 = vshrl.u32 %v247, 7
    %v249 = vsub.s32 %v246, %v248
    %v250 = vrot.slane %v236, %v249
    %v251 = vlaneseq
    %v252 = vshrl.u32 %v251, 7
    %v253 = vsub.s32 0, %v252
    %v254 = vrot.slane %v243, %v253
    %v255 = vlaneseq
    %v256 = vshrl.u32 %v255, 7
    %v257 = vsub.s32 0, %v256
    %v258 = vrot.slane %v250, %v257
    %v261 = vadd.f32 %v254, %v127
    %v262 = vadd.f32 %v254, %v132
    %v263 = vadd.f32 %v258, %v137
    %v264 = vadd.f32 %v258, %v142
    %v265 = vld [vmem:[%s3] sm:$0xff]
    %v266 = vld [vmem:[%s3 + $0x8] sm:$0xff]
    %v267 = vld [vmem:[%s3 + $0x10] sm:$0xff]
    %v268 = vld [vmem:[%s3 + $0x18] sm:$0xff]
    %v269 = vadd.f32 %v261, %v265
    %v270 = vadd.f32 %v262, %v266
    %v271 = vadd.f32 %v263, %v267
    %v272 = vadd.f32 %v264, %v268
    %v273 = vtanh.pop %v269
    %v274 = vtanh.pop %v270
    %v275 = vtanh.pop %v271
    %v276 = vtanh.pop %v272
    %v277 = vld [vmem:[%s7] sm:$0x1]
    %v279 = vlaneseq
    %v280 = vshrl.u32 %v279, 7
    %v281 = vsub.s32 0, %v280
    %v282 = vrot.slane %v277, %v281
    %v284 = vmul.f32 %v273, %v282
    %v285 = vmul.f32 %v274, %v282
    %v286 = vmul.f32 %v275, %v282
    %v287 = vmul.f32 %v276, %v282
    %288 = vadd.xlane.f32.xlu0 %v284
    %v289 = vpop.xlane.xlu0 %288
    %290 = vadd.xlane.f32.xlu0 %v285
    %v291 = vpop.xlane.xlu0 %290
    %292 = vadd.xlane.f32.xlu0 %v286
    %v293 = vpop.xlane.xlu0 %292
    %294 = vadd.xlane.f32.xlu0 %v287
    %v295 = vpop.xlane.xlu0 %294
    %v296 = vlaneseq
    %v297 = vshrl.u32 %v296, 7
    %v298 = vadd.s32 %v297, 8
    %s299 = sld [smem:[#allocation3]]
    %v300 = vstv %s299
    %vm301 = vcmp.ge.s32.totalorder %v297, %v300
    %vm302 = vcmp.ge.s32.totalorder %v298, %v300
    %vm303 = vmand 1, %vm301
    %vm304 = vmand 1, %vm302
    %vm305 = vmand 0, %vm301
    %vm306 = vmand 0, %vm302
    %v307 = vsel %vm303, -inf, %v289
    %v308 = vsel %vm304, -inf, %v291
    %v309 = vsel %vm305, -inf, %v293
    %v310 = vsel %vm306, -inf, %v295
    %s311 = sld [smem:[#allocation3 + $0x1]]
    %v312 = vstv %s311
    %vm313 = vcmp.ge.s32.totalorder %v297, %v312
    %vm314 = vcmp.ge.s32.totalorder %v298, %v312
    %vm315 = vmand 0, %vm313
    %vm316 = vmand 0, %vm314
    %vm317 = vmand 1, %vm313
    %vm318 = vmand 1, %vm314
    %v319 = vsel %vm315, -inf, %v307
    %v320 = vsel %vm316, -inf, %v308
    %v321 = vsel %vm317, -inf, %v309
    %v322 = vsel %vm318, -inf, %v310
    %v323 = vmax.f32 %v319, %v320
    %v324 = vrot.slane %v323, 4
    %v325 = vmax.f32 %v323, %v324
    %v326 = vrot.slane %v325, 2
    %v327 = vmax.f32 %v325, %v326
    %v328 = vrot.slane %v327, 1
    %v329 = vmax.f32 %v327, %v328
    %v330 = vmax.f32 %v321, %v322
    %v331 = vrot.slane %v330, 4
    %v332 = vmax.f32 %v330, %v331
    %v333 = vrot.slane %v332, 2
    %v334 = vmax.f32 %v332, %v333
    %v335 = vrot.slane %v334, 1
    %v336 = vmax.f32 %v334, %v335
    %v337 = vsub.f32 %v319, %v329
    %v338 = vsub.f32 %v320, %v329
    %v339 = vsub.f32 %v321, %v336
    %v340 = vsub.f32 %v322, %v336
    %v341 = vmul.f32 %v337, 1.442695
    %v342 = vpow.pop %v341
    %v343 = vmul.f32 %v338, 1.442695
    %v344 = vpow.pop %v343
    %v345 = vmul.f32 %v339, 1.442695
    %v346 = vpow.pop %v345
    %v347 = vmul.f32 %v340, 1.442695
    %v348 = vpow.pop %v347
    %v349 = vadd.f32 %v342, %v344
    %v350 = vrot.slane %v349, 4
    %v351 = vadd.f32 %v349, %v350
    %v352 = vrot.slane %v351, 2
    %v353 = vadd.f32 %v351, %v352
    %v354 = vrot.slane %v353, 1
    %v355 = vadd.f32 %v353, %v354
    %v356 = vadd.f32 %v346, %v348
    %v357 = vrot.slane %v356, 4
    %v358 = vadd.f32 %v356, %v357
    %v359 = vrot.slane %v358, 2
    %v360 = vadd.f32 %v358, %v359
    %v361 = vrot.slane %v360, 1
    %v362 = vadd.f32 %v360, %v361
    %v363 = vrcp.pop %v355
    %v364 = vmul.f32 %v342, %v363
    %v365 = vmul.f32 %v344, %v363
    %v366 = vrcp.pop %v362
    %v367 = vmul.f32 %v346, %v366
    %v368 = vmul.f32 %v348, %v366
    %v369 = vld [vmem:[%s4] sm:$0xff]
    %v370 = vld [vmem:[%s4 + $0x8] sm:$0xff]
    %v371 = vld [vmem:[%s4 + $0x10] sm:$0xff]
    %v372 = vld [vmem:[%s4 + $0x18] sm:$0xff]
    %v373 = vmul.f32 %v364, %v369
    %v374 = vmul.f32 %v365, %v370
    %v375 = vmul.f32 %v367, %v371
    %v376 = vmul.f32 %v368, %v372
    %v377 = vadd.f32 %v373, %v374
    %v378 = vrot.slane %v377, 4
    %v379 = vadd.f32 %v377, %v378
    %v380 = vrot.slane %v379, 2
    %v381 = vadd.f32 %v379, %v380
    %v382 = vrot.slane %v381, 1
    %v383 = vadd.f32 %v381, %v382
    %v384 = vadd.f32 %v375, %v376
    %v385 = vrot.slane %v384, 4
    %v386 = vadd.f32 %v384, %v385
    %v387 = vrot.slane %v386, 2
    %v388 = vadd.f32 %v386, %v387
    %v389 = vrot.slane %v388, 1
    %v390 = vadd.f32 %v388, %v389
    %vm393 = vcmask 1041409
    %v394 = vsel %vm393, %v390, %v383
    %396 = vst [vmem:[#allocation4] sm:$0x3] %v394
    %397 = vxpose.xlu0.b32.start [1/16] %v364, 128
    %398 = vxpose.xlu0.b32.cont [2/16] %v365, 128
    %399 = vxpose.xlu0.b32.cont [3/16] 0.0, 128
    %400 = vxpose.xlu0.b32.cont [4/16] 0.0, 128
    %401 = vxpose.xlu0.b32.cont [5/16] 0.0, 128
    %402 = vxpose.xlu0.b32.cont [6/16] 0.0, 128
    %403 = vxpose.xlu0.b32.cont [7/16] 0.0, 128
    %404 = vxpose.xlu0.b32.cont [8/16] 0.0, 128
    %405 = vxpose.xlu0.b32.cont [9/16] 0.0, 128
    %406 = vxpose.xlu0.b32.cont [10/16] 0.0, 128
    %407 = vxpose.xlu0.b32.cont [11/16] 0.0, 128
    %408 = vxpose.xlu0.b32.cont [12/16] 0.0, 128
    %409 = vxpose.xlu0.b32.cont [13/16] 0.0, 128
    %410 = vxpose.xlu0.b32.cont [14/16] 0.0, 128
    %411 = vxpose.xlu0.b32.cont [15/16] 0.0, 128
    %412 = vxpose.xlu0.b32.end [16/16] 0.0, 128
    %v413 = vpop.trf.xlu0
    %v414 = vpop.trf.xlu0
    %v415 = vpop.trf.xlu0
    %v416 = vpop.trf.xlu0
    %v417 = vpop.trf.xlu0
    %v418 = vpop.trf.xlu0
    %v419 = vpop.trf.xlu0
    %v420 = vpop.trf.xlu0
    %v421 = vpop.trf.xlu0
    %v422 = vpop.trf.xlu0
    %v423 = vpop.trf.xlu0
    %v424 = vpop.trf.xlu0
    %v425 = vpop.trf.xlu0
    %v426 = vpop.trf.xlu0
    %v427 = vpop.trf.xlu0
    %v428 = vpop.trf.xlu0
    %429 = vxpose.xlu0.b32.start [1/16] %v367, 128
    %430 = vxpose.xlu0.b32.cont [2/16] %v368, 128
    %431 = vxpose.xlu0.b32.cont [3/16] 0.0, 128
    %432 = vxpose.xlu0.b32.cont [4/16] 0.0, 128
    %433 = vxpose.xlu0.b32.cont [5/16] 0.0, 128
    %434 = vxpose.xlu0.b32.cont [6/16] 0.0, 128
    %435 = vxpose.xlu0.b32.cont [7/16] 0.0, 128
    %436 = vxpose.xlu0.b32.cont [8/16] 0.0, 128
    %437 = vxpose.xlu0.b32.cont [9/16] 0.0, 128
    %438 = vxpose.xlu0.b32.cont [10/16] 0.0, 128
    %439 = vxpose.xlu0.b32.cont [11/16] 0.0, 128
    %440 = vxpose.xlu0.b32.cont [12/16] 0.0, 128
    %441 = vxpose.xlu0.b32.cont [13/16] 0.0, 128
    %442 = vxpose.xlu0.b32.cont [14/16] 0.0, 128
    %443 = vxpose.xlu0.b32.cont [15/16] 0.0, 128
    %444 = vxpose.xlu0.b32.end [16/16] 0.0, 128
    %v445 = vpop.trf.xlu0
    %v446 = vpop.trf.xlu0
    %v447 = vpop.trf.xlu0
    %v448 = vpop.trf.xlu0
    %v449 = vpop.trf.xlu0
    %v450 = vpop.trf.xlu0
    %v451 = vpop.trf.xlu0
    %v452 = vpop.trf.xlu0
    %v453 = vpop.trf.xlu0
    %v454 = vpop.trf.xlu0
    %v455 = vpop.trf.xlu0
    %v456 = vpop.trf.xlu0
    %v457 = vpop.trf.xlu0
    %v458 = vpop.trf.xlu0
    %v459 = vpop.trf.xlu0
    %v460 = vpop.trf.xlu0
    %vm461 = vcmask 122880
    %462 = vst.msk [vmem:[#allocation6] sm:$0x1] %vm461, %v413
    %463 = vst.msk [vmem:[#allocation6 + $0x1] sm:$0x1] %vm461, %v445
    // Predicated region
    $region30: #{lsa_forward.1} parent=1 // pred_check
      _
    $region31: #{lsa_forward.1} parent=1 // pred_check_branch
      %465 = sbr.rel (0) target = $region33
    $region32: #{lsa_forward.1} parent=1 // pred_region
      %s467 = ssub.s32 32, 32
      %468 = vsyncadd [#allocation5], %s467
      %s470 = sshll.u32 [#allocation4], 4
      %s471 = int_to_ptr.vmem [resolvable:$true] %s470
      %473 = dma.vmem_to_hbm [thread:$0]  %s471, 32, %s8, [#allocation5]
    $region33: #{lsa_forward.1} parent=1 // pred_fallthru
      _
    // Predicated region
    $region34: #{lsa_forward.1} parent=1 // pred_check
      _
    $region35: #{lsa_forward.1} parent=1 // pred_check_branch
      %475 = sbr.rel (0) target = $region37
    $region36: #{lsa_forward.1} parent=1 // pred_region
      %s477 = ssub.s32 32, 32
      %478 = vsyncadd [#allocation7], %s477
      %s479 = sshll.u32 [#allocation6], 4
      %s480 = int_to_ptr.vmem [resolvable:$true] %s479
      %485 = dma.vmem_to_hbm [thread:$0]  %s480, 32, %s9, [#allocation7], 16, 16, 1
    $region37: #{lsa_forward.1} parent=1 // pred_fallthru
      _
    // Predicated region
    $region38: #{lsa_forward.1} parent=1 // pred_check
      _
    $region39: #{lsa_forward.1} parent=1 // pred_check_branch
      %487 = sbr.rel (0) target = $region41
    $region40: #{lsa_forward.1} parent=1 // pred_region
      %488 = dma.done [#allocation5], 32
    $region41: #{lsa_forward.1} parent=1 // pred_fallthru
      _
    // Predicated region
    $region42: #{lsa_forward.1} parent=1 // pred_check
      _
    $region43: #{lsa_forward.1} parent=1 // pred_check_branch
      %490 = sbr.rel (0) target = $region45
    $region44: #{lsa_forward.1} parent=1 // pred_region
      %491 = dma.done [#allocation7], 32
    $region45: #{lsa_forward.1} parent=1 // pred_fallthru
      _
    %492 = vsyncpa [#allocation5], 1
    %493 = vsyncpa [#allocation7], 1

</llo_original>
